<compile_context>
chip_gen: v7x
topology: tpu7x:2x2x1
jax: 0.10.0
libtpu: 0.0.40
codegen_flags: <defaults>
</compile_context>

<pallas_src>
import functools

import jax
import jax.numpy as jnp
from jax.experimental import pallas as pl
from jax.experimental.pallas import tpu as pltpu

IN_FEATURES = 784
HIDDEN = 120
OUT = 10
HIDDEN_PAD = 128   # 120 -> 128: lane-dense hidden activations / w2 K-dim


def _round_up(n, m):
    return ((n + m - 1) // m) * m


def _cdiv(a, b):
    return (a + b - 1) // b


def _mlp_kernel(x_ref, w1_ref, b1_ref, w2_ref, b2_ref, o_ref):
    # Cast f32 -> bf16 in-kernel: free (VPU slack under the DMA), halves HBM traffic
    # compared with a wrapper-side cast that materializes a second copy of x.
    x = x_ref[...].astype(jnp.bfloat16)

    # fc1: bf16 x bf16 -> f32 accumulation on the MXU, bias + leaky_relu(0.01) in f32.
    h = jnp.dot(x, w1_ref[...], preferred_element_type=jnp.float32)
    h = h + b1_ref[...]                       # (tb, 128) + (1, 128) broadcast
    h = jnp.where(h > 0, h, 0.01 * h)

    # fc2: narrow (128, 10) rhs -> (tb, 10) logits; bias + relu in f32; store the
    # narrow block directly (masked store is fine: kernel is DMA-bound).
    y = jnp.dot(h.astype(jnp.bfloat16), w2_ref[...],
                preferred_element_type=jnp.float32)
    y = y + b2_ref[...]                       # (tb, 10) + (1, 10) broadcast
    o_ref[...] = jnp.maximum(y, 0.0).astype(o_ref.dtype)


@functools.partial(jax.jit, static_argnames=("tile_b",))
def net_forward(x_nchw, w1, b1, w2, b2, *, tile_b=2048):
    """Forward pass of Net.

    x_nchw : (B, 1, 28, 28) float32
    w1     : (784, 120) float32  (pre-transposed PyTorch fc1.weight)
    b1     : (120,)     float32
    w2     : (120, 10)  float32  (pre-transposed PyTorch fc2.weight)
    b2     : (10,)      float32
    returns: (B, 10)    float32
    """
    x = x_nchw.reshape(-1, IN_FEATURES)          # free view; stays f32 in HBM
    B = x.shape[0]

    # Batch tile: multiple of 8, clamped to the batch.  If the batch allows it,
    # guarantee >= 2 grid steps so the "parallel" batch axis can shard across
    # both TensorCores on v7x.
    tb = max(8, _round_up(min(int(tile_b), _round_up(B, 8)), 8))
    if B >= 16 and _cdiv(B, tb) < 2:
        tb = _round_up(_cdiv(B, 2), 8)
    grid = (_cdiv(B, tb),)                       # ragged last block handled by Pallas

    # Pad weights/biases to lane-dense shapes on the hidden dim.  Padded rows/cols
    # are zero, so they contribute nothing to the real outputs (leaky_relu(0)=0).
    w1p = jnp.zeros((IN_FEATURES, HIDDEN_PAD), jnp.bfloat16).at[:, :HIDDEN].set(
        w1.astype(jnp.bfloat16))
    b1p = jnp.zeros((1, HIDDEN_PAD), jnp.float32).at[:, :HIDDEN].set(
        b1.astype(jnp.float32))
    w2p = jnp.zeros((HIDDEN_PAD, OUT), jnp.bfloat16).at[:HIDDEN, :].set(
        w2.astype(jnp.bfloat16))
    b2p = b2.astype(jnp.float32).reshape(1, OUT)

    flops = 2 * B * IN_FEATURES * HIDDEN_PAD + 2 * B * HIDDEN_PAD * OUT
    bytes_accessed = (B * IN_FEATURES * 4 + B * OUT * 4
                      + IN_FEATURES * HIDDEN_PAD * 2 + HIDDEN_PAD * OUT * 2
                      + HIDDEN_PAD * 4 + OUT * 4)

    out = pl.pallas_call(
        _mlp_kernel,
        out_shape=jax.ShapeDtypeStruct((B, OUT), jnp.float32),
        grid_spec=pltpu.PrefetchScalarGridSpec(
            num_scalar_prefetch=0,
            grid=grid,
            in_specs=[
                pl.BlockSpec((tb, IN_FEATURES), lambda i: (i, 0)),          # x tile (f32)
                pl.BlockSpec((IN_FEATURES, HIDDEN_PAD), lambda i: (0, 0)),  # w1 (resident)
                pl.BlockSpec((1, HIDDEN_PAD), lambda i: (0, 0)),            # b1
                pl.BlockSpec((HIDDEN_PAD, OUT), lambda i: (0, 0)),          # w2 (resident)
                pl.BlockSpec((1, OUT), lambda i: (0, 0)),                   # b2
            ],
            out_specs=pl.BlockSpec((tb, OUT), lambda i: (i, 0)),            # narrow logits
        ),
        compiler_params=pltpu.CompilerParams(
            dimension_semantics=("parallel",),
            vmem_limit_bytes=48 * 1024 * 1024,   # fits tb=2048 f32 x double-buffer everywhere
        ),
        cost_estimate=pl.CostEstimate(
            flops=flops, transcendentals=0, bytes_accessed=bytes_accessed),
    )(x, w1p, b1p, w2p, b2p)

    # Output already has the exact (B, 10) shape -- no slice pass needed.
    return out


def _reference_bf16(x_nchw, w1, b1, w2, b2):
    """Pure-JAX reference with the same precision pipeline as the kernel."""
    x = x_nchw.reshape(-1, IN_FEATURES).astype(jnp.bfloat16)
    h = jnp.dot(x, w1.astype(jnp.bfloat16), preferred_element_type=jnp.float32) + b1
    h = jnp.where(h > 0, h, 0.01 * h)
    y = jnp.dot(h.astype(jnp.bfloat16), w2.astype(jnp.bfloat16),
                preferred_element_type=jnp.float32) + b2
    return jnp.maximum(y, 0.0)


def _reference_f32(x_nchw, w1, b1, w2, b2):
    """Exact f32 semantics of the PyTorch module (loose sanity check)."""
    x = x_nchw.reshape(-1, IN_FEATURES)
    h = x @ w1 + b1
    h = jnp.where(h > 0, h, 0.01 * h)
    y = h @ w2 + b2
    return jnp.maximum(y, 0.0)


if __name__ == "__main__":
    key = jax.random.PRNGKey(0)
    k_x, k_w1, k_b1, k_w2, k_b2 = jax.random.split(key, 5)

    B = 4   # small batch, not a multiple of 8 -> also exercises the ragged boundary block
    x = jax.random.normal(k_x, (B, 1, 28, 28), dtype=jnp.float32)
    w1 = jax.random.normal(k_w1, (IN_FEATURES, HIDDEN), dtype=jnp.float32) * 0.05
    b1 = jax.random.normal(k_b1, (HIDDEN,), dtype=jnp.float32) * 0.05
    w2 = jax.random.normal(k_w2, (HIDDEN, OUT), dtype=jnp.float32) * 0.05
    b2 = jax.random.normal(k_b2, (OUT,), dtype=jnp.float32) * 0.05

    out = jax.block_until_ready(net_forward(x, w1, b1, w2, b2))
    ref_bf16 = jax.block_until_ready(_reference_bf16(x, w1, b1, w2, b2))
    ref_f32 = jax.block_until_ready(_reference_f32(x, w1, b1, w2, b2))

    assert out.shape == (B, OUT)
    # Tight check vs. a reference with the identical bf16-in / f32-accumulate pipeline.
    assert jnp.allclose(out, ref_bf16, atol=2e-3, rtol=2e-2), float(
        jnp.max(jnp.abs(out - ref_bf16)))
    # Loose check vs. exact f32 PyTorch semantics (bf16 quantization error only).
    assert jnp.allclose(out, ref_f32, atol=5e-2, rtol=5e-2), float(
        jnp.max(jnp.abs(out - ref_f32)))
    print("KERNEL_OK")
</pallas_src>

<mosaic_0001>
module attributes {stable_mosaic.version = 11 : i64} {
  func.func @_mlp_kernel(%arg0: i32, %arg1: memref<8x784xf32, #tpu.memory_space<vmem>>, %arg2: memref<784x128xbf16, #tpu.memory_space<vmem>>, %arg3: memref<1x128xf32, #tpu.memory_space<vmem>>, %arg4: memref<128x10xbf16, #tpu.memory_space<vmem>>, %arg5: memref<1x10xf32, #tpu.memory_space<vmem>>, %arg6: memref<8x10xf32, #tpu.memory_space<vmem>>) attributes {dimension_semantics = [#tpu.dimension_semantics<parallel>], iteration_bounds = array<i64: 1>, scalar_prefetch = 0 : i64, scratch_operands = 0 : i64, tpu.core_type = #tpu.core_type<tc>, window_params = [{transform_indices = @transform_0, window_bounds = array<i64: 8, 784>}, {pipeline_mode = #tpu.pipeline_mode<synchronous>, transform_indices = @transform_1, window_bounds = array<i64: 784, 128>}, {pipeline_mode = #tpu.pipeline_mode<synchronous>, transform_indices = @transform_2, window_bounds = array<i64: 1, 128>}, {pipeline_mode = #tpu.pipeline_mode<synchronous>, transform_indices = @transform_3, window_bounds = array<i64: 128, 10>}, {pipeline_mode = #tpu.pipeline_mode<synchronous>, transform_indices = @transform_4, window_bounds = array<i64: 1, 10>}, {transform_indices = @transform_5, window_bounds = array<i64: 8, 10>}]} {
    %c0 = arith.constant 0 : index
    %c0_0 = arith.constant 0 : index
    %0 = vector.load %arg1[%c0, %c0_0] : memref<8x784xf32, #tpu.memory_space<vmem>>, vector<8x784xf32>
    %1 = arith.truncf %0 : vector<8x784xf32> to vector<8x784xbf16>
    %c0_1 = arith.constant 0 : index
    %c0_2 = arith.constant 0 : index
    %2 = vector.load %arg2[%c0_1, %c0_2] : memref<784x128xbf16, #tpu.memory_space<vmem>>, vector<784x128xbf16>
    %cst = arith.constant dense<0.000000e+00> : vector<8x128xf32>
    %3 = tpu.matmul %1, %2, %cst {dimension_numbers = #tpu.dot_dimension_numbers<[1], [0], [0], [1], [0, 0, 1, 1], [], []>} : vector<8x784xbf16>, vector<784x128xbf16>, vector<8x128xf32> -> vector<8x128xf32>
    %c0_3 = arith.constant 0 : index
    %c0_4 = arith.constant 0 : index
    %4 = vector.load %arg3[%c0_3, %c0_4] : memref<1x128xf32, #tpu.memory_space<vmem>>, vector<1x128xf32>
    %5 = vector.broadcast %4 : vector<1x128xf32> to vector<8x128xf32>
    %6 = arith.addf %3, %5 : vector<8x128xf32>
    %cst_5 = arith.constant 0.000000e+00 : f32
    %7 = vector.broadcast %cst_5 : f32 to vector<8x128xf32>
    %8 = arith.cmpf ogt, %6, %7 : vector<8x128xf32>
    %cst_6 = arith.constant 0.00999999977 : f32
    %9 = vector.broadcast %cst_6 : f32 to vector<8x128xf32>
    %10 = arith.mulf %9, %6 : vector<8x128xf32>
    %11 = arith.select %8, %6, %10 : vector<8x128xi1>, vector<8x128xf32>
    %12 = arith.truncf %11 : vector<8x128xf32> to vector<8x128xbf16>
    %c0_7 = arith.constant 0 : index
    %c0_8 = arith.constant 0 : index
    %13 = vector.load %arg4[%c0_7, %c0_8] : memref<128x10xbf16, #tpu.memory_space<vmem>>, vector<128x10xbf16>
    %cst_9 = arith.constant dense<0.000000e+00> : vector<8x10xf32>
    %14 = tpu.matmul %12, %13, %cst_9 {dimension_numbers = #tpu.dot_dimension_numbers<[1], [0], [0], [1], [0, 0, 1, 1], [], []>} : vector<8x128xbf16>, vector<128x10xbf16>, vector<8x10xf32> -> vector<8x10xf32>
    %c0_10 = arith.constant 0 : index
    %c0_11 = arith.constant 0 : index
    %15 = vector.load %arg5[%c0_10, %c0_11] : memref<1x10xf32, #tpu.memory_space<vmem>>, vector<1x10xf32>
    %16 = vector.broadcast %15 : vector<1x10xf32> to vector<8x10xf32>
    %17 = arith.addf %14, %16 : vector<8x10xf32>
    %cst_12 = arith.constant 0.000000e+00 : f32
    %18 = vector.broadcast %cst_12 : f32 to vector<8x10xf32>
    %19 = arith.maximumf %17, %18 : vector<8x10xf32>
    %c0_13 = arith.constant 0 : index
    %c0_14 = arith.constant 0 : index
    %20 = vector.load %arg6[%c0_13, %c0_14] : memref<8x10xf32, #tpu.memory_space<vmem>>, vector<8x10xf32>
    tpu.vector_store %arg6[%c0_13, %c0_14], %19 {strides = array<i32>} : memref<8x10xf32, #tpu.memory_space<vmem>>, vector<8x10xf32>,
    return
  }
  func.func @transform_0(%arg0: i32) -> (i32, i32) {
    %c0_i32 = arith.constant 0 : i32
    %c0_i32_0 = arith.constant 0 : i32
    return %arg0, %c0_i32 : i32, i32
  }
  func.func @transform_1(%arg0: i32) -> (i32, i32) {
    %c0_i32 = arith.constant 0 : i32
    %c0_i32_0 = arith.constant 0 : i32
    %c0_i32_1 = arith.constant 0 : i32
    return %c0_i32, %c0_i32_0 : i32, i32
  }
  func.func @transform_2(%arg0: i32) -> (i32, i32) {
    %c0_i32 = arith.constant 0 : i32
    %c0_i32_0 = arith.constant 0 : i32
    %c0_i32_1 = arith.constant 0 : i32
    return %c0_i32, %c0_i32_0 : i32, i32
  }
  func.func @transform_3(%arg0: i32) -> (i32, i32) {
    %c0_i32 = arith.constant 0 : i32
    %c0_i32_0 = arith.constant 0 : i32
    %c0_i32_1 = arith.constant 0 : i32
    return %c0_i32, %c0_i32_0 : i32, i32
  }
  func.func @transform_4(%arg0: i32) -> (i32, i32) {
    %c0_i32 = arith.constant 0 : i32
    %c0_i32_0 = arith.constant 0 : i32
    %c0_i32_1 = arith.constant 0 : i32
    return %c0_i32, %c0_i32_0 : i32, i32
  }
  func.func @transform_5(%arg0: i32) -> (i32, i32) {
    %c0_i32 = arith.constant 0 : i32
    %c0_i32_0 = arith.constant 0 : i32
    return %arg0, %c0_i32 : i32, i32
  }
}

</mosaic_0001>

<llo_original>
// kernel: net_forward.1
$region0: #{net_forward.1}
  #allocation0 [shape = 'u32[]', space=smem, size = 0x4, offset = 0x4, fixed_abs, tag = 'smem constant byte address 0x4 - core index']
  #allocation1 [shape = 'u32[144,128]{1,0:T(1,128)}', space=vmem, size = 0x12000, scoped, tag = 'internal scratch']
  %s0 = inlined_call_operand.vmem [shape: f32[4,784], index: 0, kind: input, shape index: {}]
  %s1 = inlined_call_operand.vmem [shape: bf16[784,128], index: 1, kind: input, shape index: {}]
  %s2 = inlined_call_operand.vmem [shape: f32[1,128], index: 2, kind: input, shape index: {}]
  %s3 = inlined_call_operand.vmem [shape: bf16[128,10], index: 3, kind: input, shape index: {}]
  %s4 = inlined_call_operand.vmem [shape: f32[1,10], index: 4, kind: input, shape index: {}]
  %s5 = inlined_call_operand.hbm [shape: f32[4,10], index: 5, kind: output, shape index: {}]
  %s6 = sld [smem:[#allocation0]]
  $region30: #{net_forward.1} parent=0
    _
  %s8 = ssub.s32 1, %s6
  %s9 = scalar_select 0, %s8, %s6
  $region1: #{net_forward.1} parent=0
    #allocation2 [shape = 'u8[4096]{0}', space=vmem, size = 0x1000, scoped, tag = 'output window, operand 0, single buffered']
    #allocation3 [shape = 's32[1]{0}', space=sflag, size = 0x4, scoped, tag = 'scoped memory for net_forward.1']
    %10 = vsyncpa [#allocation3], 0
    // Predicated region
    $region2: #{net_forward.1} parent=1 // pred_check
      _
    $region3: #{net_forward.1} parent=1 // pred_check_branch
      %12 = sbr.rel (0) target = $region5
    $region4: #{net_forward.1} parent=1 // pred_region
      _
    $region5: #{net_forward.1} parent=1 // pred_fallthru
      _
    // Predicated region
    $region6: #{net_forward.1} parent=1 // pred_check
      _
    $region7: #{net_forward.1} parent=1 // pred_check_branch
      %14 = sbr.rel (0) target = $region9
    $region8: #{net_forward.1} parent=1 // pred_region
      _
    $region9: #{net_forward.1} parent=1 // pred_fallthru
      _
    // Predicated region
    $region10: #{net_forward.1} parent=1 // pred_check
      _
    $region11: #{net_forward.1} parent=1 // pred_check_branch
      %16 = sbr.rel (0) target = $region13
    $region12: #{net_forward.1} parent=1 // pred_region
      _
    $region13: #{net_forward.1} parent=1 // pred_fallthru
      _
    // Predicated region
    $region14: #{net_forward.1} parent=1 // pred_check
      _
    $region15: #{net_forward.1} parent=1 // pred_check_branch
      %18 = sbr.rel (0) target = $region17
    $region16: #{net_forward.1} parent=1 // pred_region
      _
    $region17: #{net_forward.1} parent=1 // pred_fallthru
      _
    // Predicated region
    $region18: #{net_forward.1} parent=1 // pred_check
      _
    $region19: #{net_forward.1} parent=1 // pred_check_branch
      %20 = sbr.rel (0) target = $region21
    $region20: #{net_forward.1} parent=1 // pred_region
      _
    $region21: #{net_forward.1} parent=1 // pred_fallthru
      _
    %v22 = vld [vmem:[%s0] sm:$0xff]
    %v23 = vld [vmem:[%s0 + $0x8] sm:$0xff]
    %v24 = vld [vmem:[%s0 + $0x10] sm:$0xff]
    %v25 = vld [vmem:[%s0 + $0x18] sm:$0xf]
    %v26 = vld [vmem:[%s0 + $0x1c] sm:$0xff]
    %v27 = vld [vmem:[%s0 + $0x24] sm:$0xff]
    %v28 = vld [vmem:[%s0 + $0x2c] sm:$0xff]
    %v29 = vld [vmem:[%s0 + $0x34] sm:$0xf]
    %v38 = vcombine.low %v22, %v26
    %v39 = vcombine.high %v22, %v26
    %v40 = vcombine.low %v23, %v27
    %v41 = vcombine.high %v23, %v27
    %v42 = vcombine.low %v24, %v28
    %v43 = vcombine.high %v24, %v28
    %v44 = vcombine.low %v25, %v29
    %v52 = vpack.c.bf16 %v38, %v38
    %v53 = vpack.c.bf16 %v39, %v39
    %v54 = vpack.c.bf16 %v40, %v40
    %v55 = vpack.c.bf16 %v41, %v41
    %v56 = vpack.c.bf16 %v42, %v42
    %v57 = vpack.c.bf16 %v43, %v43
    %v58 = vpack.c.bf16 %v44, %v44
    %v59 = vld [vmem:[%s1] sm:$0xf]
    %v60 = vld [vmem:[%s1 + $0x4] sm:$0xf]
    %v61 = vld [vmem:[%s1 + $0x8] sm:$0xf]
    %v62 = vld [vmem:[%s1 + $0xc] sm:$0xf]
    %v63 = vld [vmem:[%s1 + $0x10] sm:$0xf]
    %v64 = vld [vmem:[%s1 + $0x14] sm:$0xf]
    %v65 = vld [vmem:[%s1 + $0x18] sm:$0xf]
    %v66 = vld [vmem:[%s1 + $0x1c] sm:$0xf]
    %v67 = vld [vmem:[%s1 + $0x20] sm:$0xf]
    %v68 = vld [vmem:[%s1 + $0x24] sm:$0xf]
    %v69 = vld [vmem:[%s1 + $0x28] sm:$0xf]
    %v70 = vld [vmem:[%s1 + $0x2c] sm:$0xf]
    %v71 = vld [vmem:[%s1 + $0x30] sm:$0xf]
    %v72 = vld [vmem:[%s1 + $0x34] sm:$0xf]
    %v73 = vld [vmem:[%s1 + $0x38] sm:$0xf]
    %v74 = vld [vmem:[%s1 + $0x3c] sm:$0xf]
    %v75 = vld [vmem:[%s1 + $0x40] sm:$0xf]
    %v76 = vld [vmem:[%s1 + $0x44] sm:$0xf]
    %v77 = vld [vmem:[%s1 + $0x48] sm:$0xf]
    %v78 = vld [vmem:[%s1 + $0x4c] sm:$0xf]
    %v79 = vld [vmem:[%s1 + $0x50] sm:$0xf]
    %v80 = vld [vmem:[%s1 + $0x54] sm:$0xf]
    %v81 = vld [vmem:[%s1 + $0x58] sm:$0xf]
    %v82 = vld [vmem:[%s1 + $0x5c] sm:$0xf]
    %v83 = vld [vmem:[%s1 + $0x60] sm:$0xf]
    %v84 = vld [vmem:[%s1 + $0x64] sm:$0xf]
    %v85 = vld [vmem:[%s1 + $0x68] sm:$0xf]
    %v86 = vld [vmem:[%s1 + $0x6c] sm:$0xf]
    %v87 = vld [vmem:[%s1 + $0x70] sm:$0xf]
    %v88 = vld [vmem:[%s1 + $0x74] sm:$0xf]
    %v89 = vld [vmem:[%s1 + $0x78] sm:$0xf]
    %v90 = vld [vmem:[%s1 + $0x7c] sm:$0xf]
    %v91 = vld [vmem:[%s1 + $0x80] sm:$0xf]
    %v92 = vld [vmem:[%s1 + $0x84] sm:$0xf]
    %v93 = vld [vmem:[%s1 + $0x88] sm:$0xf]
    %v94 = vld [vmem:[%s1 + $0x8c] sm:$0xf]
    %v95 = vld [vmem:[%s1 + $0x90] sm:$0xf]
    %v96 = vld [vmem:[%s1 + $0x94] sm:$0xf]
    %v97 = vld [vmem:[%s1 + $0x98] sm:$0xf]
    %v98 = vld [vmem:[%s1 + $0x9c] sm:$0xf]
    %v99 = vld [vmem:[%s1 + $0xa0] sm:$0xf]
    %v100 = vld [vmem:[%s1 + $0xa4] sm:$0xf]
    %v101 = vld [vmem:[%s1 + $0xa8] sm:$0xf]
    %v102 = vld [vmem:[%s1 + $0xac] sm:$0xf]
    %v103 = vld [vmem:[%s1 + $0xb0] sm:$0xf]
    %v104 = vld [vmem:[%s1 + $0xb4] sm:$0xf]
    %v105 = vld [vmem:[%s1 + $0xb8] sm:$0xf]
    %v106 = vld [vmem:[%s1 + $0xbc] sm:$0xf]
    %v107 = vld [vmem:[%s1 + $0xc0] sm:$0xf]
    %v108 = vld [vmem:[%s1 + $0xc4] sm:$0xf]
    %v109 = vld [vmem:[%s1 + $0xc8] sm:$0xf]
    %v110 = vld [vmem:[%s1 + $0xcc] sm:$0xf]
    %v111 = vld [vmem:[%s1 + $0xd0] sm:$0xf]
    %v112 = vld [vmem:[%s1 + $0xd4] sm:$0xf]
    %v113 = vld [vmem:[%s1 + $0xd8] sm:$0xf]
    %v114 = vld [vmem:[%s1 + $0xdc] sm:$0xf]
    %v115 = vld [vmem:[%s1 + $0xe0] sm:$0xf]
    %v116 = vld [vmem:[%s1 + $0xe4] sm:$0xf]
    %v117 = vld [vmem:[%s1 + $0xe8] sm:$0xf]
    %v118 = vld [vmem:[%s1 + $0xec] sm:$0xf]
    %v119 = vld [vmem:[%s1 + $0xf0] sm:$0xf]
    %v120 = vld [vmem:[%s1 + $0xf4] sm:$0xf]
    %v121 = vld [vmem:[%s1 + $0xf8] sm:$0xf]
    %v122 = vld [vmem:[%s1 + $0xfc] sm:$0xf]
    %v123 = vld [vmem:[%s1 + $0x100] sm:$0xf]
    %v124 = vld [vmem:[%s1 + $0x104] sm:$0xf]
    %v125 = vld [vmem:[%s1 + $0x108] sm:$0xf]
    %v126 = vld [vmem:[%s1 + $0x10c] sm:$0xf]
    %v127 = vld [vmem:[%s1 + $0x110] sm:$0xf]
    %v128 = vld [vmem:[%s1 + $0x114] sm:$0xf]
    %v129 = vld [vmem:[%s1 + $0x118] sm:$0xf]
    %v130 = vld [vmem:[%s1 + $0x11c] sm:$0xf]
    %v131 = vld [vmem:[%s1 + $0x120] sm:$0xf]
    %v132 = vld [vmem:[%s1 + $0x124] sm:$0xf]
    %v133 = vld [vmem:[%s1 + $0x128] sm:$0xf]
    %v134 = vld [vmem:[%s1 + $0x12c] sm:$0xf]
    %v135 = vld [vmem:[%s1 + $0x130] sm:$0xf]
    %v136 = vld [vmem:[%s1 + $0x134] sm:$0xf]
    %v137 = vld [vmem:[%s1 + $0x138] sm:$0xf]
    %v138 = vld [vmem:[%s1 + $0x13c] sm:$0xf]
    %v139 = vld [vmem:[%s1 + $0x140] sm:$0xf]
    %v140 = vld [vmem:[%s1 + $0x144] sm:$0xf]
    %v141 = vld [vmem:[%s1 + $0x148] sm:$0xf]
    %v142 = vld [vmem:[%s1 + $0x14c] sm:$0xf]
    %v143 = vld [vmem:[%s1 + $0x150] sm:$0xf]
    %v144 = vld [vmem:[%s1 + $0x154] sm:$0xf]
    %v145 = vld [vmem:[%s1 + $0x158] sm:$0xf]
    %v146 = vld [vmem:[%s1 + $0x15c] sm:$0xf]
    %v147 = vld [vmem:[%s1 + $0x160] sm:$0xf]
    %v148 = vld [vmem:[%s1 + $0x164] sm:$0xf]
    %v149 = vld [vmem:[%s1 + $0x168] sm:$0xf]
    %v150 = vld [vmem:[%s1 + $0x16c] sm:$0xf]
    %v151 = vld [vmem:[%s1 + $0x170] sm:$0xf]
    %v152 = vld [vmem:[%s1 + $0x174] sm:$0xf]
    %v153 = vld [vmem:[%s1 + $0x178] sm:$0xf]
    %v154 = vld [vmem:[%s1 + $0x17c] sm:$0xf]
    %v155 = vld [vmem:[%s1 + $0x180] sm:$0xf]
    %v156 = vld [vmem:[%s1 + $0x184] sm:$0xf]
    %v157 = vld [vmem:[%s2] sm:$0x1]
    %v159 = vlaneseq
    %v160 = vshrl.u32 %v159, 7
    %v161 = vsub.s32 0, %v160
    %v162 = vrot.slane %v157, %v161
    %v262 = vunpack.c.l.b16 %v59
    %v263 = vunpack.c.l.b16 %v60
    %v264 = vunpack.c.l.b16 %v61
    %v265 = vunpack.c.l.b16 %v62
    %v266 = vunpack.c.l.b16 %v63
    %v267 = vunpack.c.l.b16 %v64
    %v268 = vunpack.c.l.b16 %v65
    %v269 = vunpack.c.l.b16 %v66
    %v270 = vunpack.c.l.b16 %v67
    %v271 = vunpack.c.l.b16 %v68
    %v272 = vunpack.c.l.b16 %v69
    %v273 = vunpack.c.l.b16 %v70
    %v274 = vunpack.c.l.b16 %v71
    %v275 = vunpack.c.l.b16 %v72
    %v276 = vunpack.c.l.b16 %v73
    %v277 = vunpack.c.l.b16 %v74
    %v278 = vunpack.c.l.b16 %v75
    %v279 = vunpack.c.l.b16 %v76
    %v280 = vunpack.c.l.b16 %v77
    %v281 = vunpack.c.l.b16 %v78
    %v282 = vunpack.c.l.b16 %v79
    %v283 = vunpack.c.l.b16 %v80
    %v284 = vunpack.c.l.b16 %v81
    %v285 = vunpack.c.l.b16 %v82
    %v286 = vunpack.c.l.b16 %v83
    %v287 = vunpack.c.l.b16 %v84
    %v288 = vunpack.c.l.b16 %v85
    %v289 = vunpack.c.l.b16 %v86
    %v290 = vunpack.c.l.b16 %v87
    %v291 = vunpack.c.l.b16 %v88
    %v292 = vunpack.c.l.b16 %v89
    %v293 = vunpack.c.l.b16 %v90
    %v294 = vunpack.c.l.b16 %v91
    %v295 = vunpack.c.l.b16 %v92
    %v296 = vunpack.c.l.b16 %v93
    %v297 = vunpack.c.l.b16 %v94
    %v298 = vunpack.c.l.b16 %v95
    %v299 = vunpack.c.l.b16 %v96
    %v300 = vunpack.c.l.b16 %v97
    %v301 = vunpack.c.l.b16 %v98
    %v302 = vunpack.c.l.b16 %v99
    %v303 = vunpack.c.l.b16 %v100
    %v304 = vunpack.c.l.b16 %v101
    %v305 = vunpack.c.l.b16 %v102
    %v306 = vunpack.c.l.b16 %v103
    %v307 = vunpack.c.l.b16 %v104
    %v308 = vunpack.c.l.b16 %v105
    %v309 = vunpack.c.l.b16 %v106
    %v310 = vunpack.c.l.b16 %v107
    %v311 = vunpack.c.l.b16 %v108
    %v312 = vunpack.c.l.b16 %v109
    %v313 = vunpack.c.l.b16 %v110
    %v314 = vunpack.c.l.b16 %v111
    %v315 = vunpack.c.l.b16 %v112
    %v316 = vunpack.c.l.b16 %v113
    %v317 = vunpack.c.l.b16 %v114
    %v318 = vunpack.c.l.b16 %v115
    %v319 = vunpack.c.l.b16 %v116
    %v320 = vunpack.c.l.b16 %v117
    %v321 = vunpack.c.l.b16 %v118
    %v322 = vunpack.c.l.b16 %v119
    %v323 = vunpack.c.l.b16 %v120
    %v324 = vunpack.c.l.b16 %v121
    %v325 = vunpack.c.l.b16 %v122
    %v326 = vunpack.c.l.b16 %v123
    %v327 = vunpack.c.l.b16 %v124
    %v328 = vunpack.c.l.b16 %v125
    %v329 = vunpack.c.l.b16 %v126
    %v330 = vunpack.c.l.b16 %v127
    %v331 = vunpack.c.l.b16 %v128
    %v332 = vunpack.c.l.b16 %v129
    %v333 = vunpack.c.l.b16 %v130
    %v334 = vunpack.c.l.b16 %v131
    %v335 = vunpack.c.l.b16 %v132
    %v336 = vunpack.c.l.b16 %v133
    %v337 = vunpack.c.l.b16 %v134
    %v338 = vunpack.c.l.b16 %v135
    %v339 = vunpack.c.l.b16 %v136
    %v340 = vunpack.c.l.b16 %v137
    %v341 = vunpack.c.l.b16 %v138
    %v342 = vunpack.c.l.b16 %v139
    %v343 = vunpack.c.l.b16 %v140
    %v344 = vunpack.c.l.b16 %v141
    %v345 = vunpack.c.l.b16 %v142
    %v346 = vunpack.c.l.b16 %v143
    %v347 = vunpack.c.l.b16 %v144
    %v348 = vunpack.c.l.b16 %v145
    %v349 = vunpack.c.l.b16 %v146
    %v350 = vunpack.c.l.b16 %v147
    %v351 = vunpack.c.l.b16 %v148
    %v352 = vunpack.c.l.b16 %v149
    %v353 = vunpack.c.l.b16 %v150
    %v354 = vunpack.c.l.b16 %v151
    %v355 = vunpack.c.l.b16 %v152
    %v356 = vunpack.c.l.b16 %v153
    %v357 = vunpack.c.l.b16 %v154
    %v358 = vunpack.c.l.b16 %v155
    %v359 = vunpack.c.l.b16 %v156
    %v360 = vpack.c.b16 %v263, %v262
    %v361 = vpack.c.b16 %v265, %v264
    %v362 = vpack.c.b16 %v267, %v266
    %v363 = vpack.c.b16 %v269, %v268
    %v364 = vpack.c.b16 %v271, %v270
    %v365 = vpack.c.b16 %v273, %v272
    %v366 = vpack.c.b16 %v275, %v274
    %v367 = vpack.c.b16 %v277, %v276
    %v368 = vpack.c.b16 %v279, %v278
    %v369 = vpack.c.b16 %v281, %v280
    %v370 = vpack.c.b16 %v283, %v282
    %v371 = vpack.c.b16 %v285, %v284
    %v372 = vpack.c.b16 %v287, %v286
    %v373 = vpack.c.b16 %v289, %v288
    %v374 = vpack.c.b16 %v291, %v290
    %v375 = vpack.c.b16 %v293, %v292
    %v376 = vpack.c.b16 %v295, %v294
    %v377 = vpack.c.b16 %v297, %v296
    %v378 = vpack.c.b16 %v299, %v298
    %v379 = vpack.c.b16 %v301, %v300
    %v380 = vpack.c.b16 %v303, %v302
    %v381 = vpack.c.b16 %v305, %v304
    %v382 = vpack.c.b16 %v307, %v306
    %v383 = vpack.c.b16 %v309, %v308
    %v384 = vpack.c.b16 %v311, %v310
    %v385 = vpack.c.b16 %v313, %v312
    %v386 = vpack.c.b16 %v315, %v314
    %v387 = vpack.c.b16 %v317, %v316
    %v388 = vpack.c.b16 %v319, %v318
    %v389 = vpack.c.b16 %v321, %v320
    %v390 = vpack.c.b16 %v323, %v322
    %v391 = vpack.c.b16 %v325, %v324
    %v392 = vpack.c.b16 %v327, %v326
    %v393 = vpack.c.b16 %v329, %v328
    %v394 = vpack.c.b16 %v331, %v330
    %v395 = vpack.c.b16 %v333, %v332
    %v396 = vpack.c.b16 %v335, %v334
    %v397 = vpack.c.b16 %v337, %v336
    %v398 = vpack.c.b16 %v339, %v338
    %v399 = vpack.c.b16 %v341, %v340
    %v400 = vpack.c.b16 %v343, %v342
    %v401 = vpack.c.b16 %v345, %v344
    %v402 = vpack.c.b16 %v347, %v346
    %v403 = vpack.c.b16 %v349, %v348
    %v404 = vpack.c.b16 %v351, %v350
    %v405 = vpack.c.b16 %v353, %v352
    %v406 = vpack.c.b16 %v355, %v354
    %v407 = vpack.c.b16 %v357, %v356
    %v408 = vpack.c.b16 %v359, %v358
    %vm458 = vcmask 130048
    %v460 = vsel %vm458, %v58, 0
    %462 = vmatprep.subr.bf16.mxu0 0
    %463 = vmatpush1.bf16.msra.mxu0 %v360
    %464 = vmatprep.subr.bf16.mxu0 0
    %465 = vmatpush1.bf16.msra.mxu0 %v361
    %466 = vmatprep.subr.bf16.mxu0 0
    %467 = vmatpush1.bf16.msra.mxu0 %v362
    %468 = vmatprep.subr.bf16.mxu0 0
    %469 = vmatpush1.bf16.msra.mxu0 %v363
    %470 = vmatprep.subr.bf16.mxu0 0
    %471 = vmatpush1.bf16.msra.mxu0 %v364
    %472 = vmatprep.subr.bf16.mxu0 0
    %473 = vmatpush1.bf16.msra.mxu0 %v365
    %474 = vmatprep.subr.bf16.mxu0 0
    %475 = vmatpush1.bf16.msra.mxu0 %v366
    %476 = vmatprep.subr.bf16.mxu0 0
    %477 = vmatpush1.bf16.msra.mxu0 %v367
    %478 = vmatprep.subr.bf16.mxu0 0
    %479 = vmatpush1.bf16.msra.mxu0 %v368
    %480 = vmatprep.subr.bf16.mxu0 0
    %481 = vmatpush1.bf16.msra.mxu0 %v369
    %482 = vmatprep.subr.bf16.mxu0 0
    %483 = vmatpush1.bf16.msra.mxu0 %v370
    %484 = vmatprep.subr.bf16.mxu0 0
    %485 = vmatpush1.bf16.msra.mxu0 %v371
    %486 = vmatprep.subr.bf16.mxu0 0
    %487 = vmatpush1.bf16.msra.mxu0 %v372
    %488 = vmatprep.subr.bf16.mxu0 0
    %489 = vmatpush1.bf16.msra.mxu0 %v373
    %490 = vmatprep.subr.bf16.mxu0 0
    %491 = vmatpush1.bf16.msra.mxu0 %v374
    %492 = vmatprep.subr.bf16.mxu0 0
    %493 = vmatpush1.bf16.msra.mxu0 %v375
    %494 = vmatprep.mubr.bf16.mxu0 %v53
    %495 = vmatmul.mubr.bf16.gmra.mrb[0].mxu0 %v52
    %v496 = vpop.f32.mrb[0].mxu0
    %v497 = vadd.f32 %v162, %v496
    %v498 = vpop.f32.mrb[0].mxu0
    %v499 = vpop.f32.mrb[0].mxu0
    %v500 = vpop.f32.mrb[0].mxu0
    %501 = vdwg.mxu0
    %502 = vmatprep.subr.bf16.mxu0 0
    %503 = vmatpush1.bf16.msra.mxu0 %v376
    %504 = vmatprep.subr.bf16.mxu0 0
    %505 = vmatpush1.bf16.msra.mxu0 %v377
    %506 = vmatprep.subr.bf16.mxu0 0
    %507 = vmatpush1.bf16.msra.mxu0 %v378
    %508 = vmatprep.subr.bf16.mxu0 0
    %509 = vmatpush1.bf16.msra.mxu0 %v379
    %510 = vmatprep.subr.bf16.mxu0 0
    %511 = vmatpush1.bf16.msra.mxu0 %v380
    %512 = vmatprep.subr.bf16.mxu0 0
    %513 = vmatpush1.bf16.msra.mxu0 %v381
    %514 = vmatprep.subr.bf16.mxu0 0
    %515 = vmatpush1.bf16.msra.mxu0 %v382
    %516 = vmatprep.subr.bf16.mxu0 0
    %517 = vmatpush1.bf16.msra.mxu0 %v383
    %518 = vmatprep.subr.bf16.mxu0 0
    %519 = vmatpush1.bf16.msra.mxu0 %v384
    %520 = vmatprep.subr.bf16.mxu0 0
    %521 = vmatpush1.bf16.msra.mxu0 %v385
    %522 = vmatprep.subr.bf16.mxu0 0
    %523 = vmatpush1.bf16.msra.mxu0 %v386
    %524 = vmatprep.subr.bf16.mxu0 0
    %525 = vmatpush1.bf16.msra.mxu0 %v387
    %526 = vmatprep.subr.bf16.mxu0 0
    %527 = vmatpush1.bf16.msra.mxu0 %v388
    %528 = vmatprep.subr.bf16.mxu0 0
    %529 = vmatpush1.bf16.msra.mxu0 %v389
    %530 = vmatprep.subr.bf16.mxu0 0
    %531 = vmatpush1.bf16.msra.mxu0 %v390
    %532 = vmatprep.subr.bf16.mxu0 0
    %533 = vmatpush1.bf16.msra.mxu0 %v391
    %534 = vmatprep.mubr.bf16.mxu0 %v55
    %535 = vmatmul.mubr.bf16.gmra.mrb[0].mxu0 %v54
    %v536 = vpop.f32.mrb[0].mxu0
    %v537 = vadd.f32 %v497, %v536
    %v538 = vpop.f32.mrb[0].mxu0
    %v539 = vpop.f32.mrb[0].mxu0
    %v540 = vpop.f32.mrb[0].mxu0
    %541 = vdwg.mxu0
    %542 = vmatprep.subr.bf16.mxu0 0
    %543 = vmatpush1.bf16.msra.mxu0 %v392
    %544 = vmatprep.subr.bf16.mxu0 0
    %545 = vmatpush1.bf16.msra.mxu0 %v393
    %546 = vmatprep.subr.bf16.mxu0 0
    %547 = vmatpush1.bf16.msra.mxu0 %v394
    %548 = vmatprep.subr.bf16.mxu0 0
    %549 = vmatpush1.bf16.msra.mxu0 %v395
    %550 = vmatprep.subr.bf16.mxu0 0
    %551 = vmatpush1.bf16.msra.mxu0 %v396
    %552 = vmatprep.subr.bf16.mxu0 0
    %553 = vmatpush1.bf16.msra.mxu0 %v397
    %554 = vmatprep.subr.bf16.mxu0 0
    %555 = vmatpush1.bf16.msra.mxu0 %v398
    %556 = vmatprep.subr.bf16.mxu0 0
    %557 = vmatpush1.bf16.msra.mxu0 %v399
    %558 = vmatprep.subr.bf16.mxu0 0
    %559 = vmatpush1.bf16.msra.mxu0 %v400
    %560 = vmatprep.subr.bf16.mxu0 0
    %561 = vmatpush1.bf16.msra.mxu0 %v401
    %562 = vmatprep.subr.bf16.mxu0 0
    %563 = vmatpush1.bf16.msra.mxu0 %v402
    %564 = vmatprep.subr.bf16.mxu0 0
    %565 = vmatpush1.bf16.msra.mxu0 %v403
    %566 = vmatprep.subr.bf16.mxu0 0
    %567 = vmatpush1.bf16.msra.mxu0 %v404
    %568 = vmatprep.subr.bf16.mxu0 0
    %569 = vmatpush1.bf16.msra.mxu0 %v405
    %570 = vmatprep.subr.bf16.mxu0 0
    %571 = vmatpush1.bf16.msra.mxu0 %v406
    %572 = vmatprep.subr.bf16.mxu0 0
    %573 = vmatpush1.bf16.msra.mxu0 %v407
    %574 = vmatprep.mubr.bf16.mxu0 %v57
    %575 = vmatmul.mubr.bf16.gmra.mrb[0].mxu0 %v56
    %v576 = vpop.f32.mrb[0].mxu0
    %v577 = vadd.f32 %v537, %v576
    %v578 = vpop.f32.mrb[0].mxu0
    %v579 = vpop.f32.mrb[0].mxu0
    %v580 = vpop.f32.mrb[0].mxu0
    %581 = vdwg.mxu0
    %582 = vmatprep.subr.bf16.mxu0 0
    %583 = vmatpush1.bf16.msra.mxu0 %v408
    %584 = vmatprep.subr.bf16.mxu0 0
    %585 = vmatpush1.bf16.msra.mxu0 0
    %586 = vmatprep.subr.bf16.mxu0 0
    %587 = vmatpush1.bf16.msra.mxu0 0
    %588 = vmatprep.subr.bf16.mxu0 0
    %589 = vmatpush1.bf16.msra.mxu0 0
    %590 = vmatprep.subr.bf16.mxu0 0
    %591 = vmatpush1.bf16.msra.mxu0 0
    %592 = vmatprep.subr.bf16.mxu0 0
    %593 = vmatpush1.bf16.msra.mxu0 0
    %594 = vmatprep.subr.bf16.mxu0 0
    %595 = vmatpush1.bf16.msra.mxu0 0
    %596 = vmatprep.subr.bf16.mxu0 0
    %597 = vmatpush1.bf16.msra.mxu0 0
    %598 = vmatprep.subr.bf16.mxu0 0
    %599 = vmatpush1.bf16.msra.mxu0 0
    %600 = vmatprep.subr.bf16.mxu0 0
    %601 = vmatpush1.bf16.msra.mxu0 0
    %602 = vmatprep.subr.bf16.mxu0 0
    %603 = vmatpush1.bf16.msra.mxu0 0
    %604 = vmatprep.subr.bf16.mxu0 0
    %605 = vmatpush1.bf16.msra.mxu0 0
    %606 = vmatprep.subr.bf16.mxu0 0
    %607 = vmatpush1.bf16.msra.mxu0 0
    %608 = vmatprep.subr.bf16.mxu0 0
    %609 = vmatpush1.bf16.msra.mxu0 0
    %610 = vmatprep.subr.bf16.mxu0 0
    %611 = vmatpush1.bf16.msra.mxu0 0
    %612 = vmatprep.subr.bf16.mxu0 0
    %613 = vmatpush1.bf16.msra.mxu0 0
    %614 = vmatprep.mubr.bf16.mxu0 0
    %615 = vmatmul.mubr.bf16.gmra.mrb[0].mxu0 %v460
    %v616 = vpop.f32.mrb[0].mxu0
    %v617 = vadd.f32 %v577, %v616
    %v618 = vpop.f32.mrb[0].mxu0
    %v619 = vpop.f32.mrb[0].mxu0
    %v620 = vpop.f32.mrb[0].mxu0
    %621 = vdwg.mxu0
    %vm622 = vcmp.gt.f32.partialorder %v617, 0.0
    %v623 = vmul.f32 %v617, 0.01
    %v624 = vsel %vm622, %v617, %v623
    %v625 = vpack.c.bf16 %v624, %v624
    %v626 = vld [vmem:[%s3] sm:$0xf]
    %v627 = vld [vmem:[%s3 + $0x4] sm:$0xf]
    %v628 = vld [vmem:[%s3 + $0x8] sm:$0xf]
    %v629 = vld [vmem:[%s3 + $0xc] sm:$0xf]
    %v630 = vld [vmem:[%s3 + $0x10] sm:$0xf]
    %v631 = vld [vmem:[%s3 + $0x14] sm:$0xf]
    %v632 = vld [vmem:[%s3 + $0x18] sm:$0xf]
    %v633 = vld [vmem:[%s3 + $0x1c] sm:$0xf]
    %v634 = vld [vmem:[%s3 + $0x20] sm:$0xf]
    %v635 = vld [vmem:[%s3 + $0x24] sm:$0xf]
    %v636 = vld [vmem:[%s3 + $0x28] sm:$0xf]
    %v637 = vld [vmem:[%s3 + $0x2c] sm:$0xf]
    %v638 = vld [vmem:[%s3 + $0x30] sm:$0xf]
    %v639 = vld [vmem:[%s3 + $0x34] sm:$0xf]
    %v640 = vld [vmem:[%s3 + $0x38] sm:$0xf]
    %v641 = vld [vmem:[%s3 + $0x3c] sm:$0xf]
    %v642 = vld [vmem:[%s4] sm:$0x1]
    %v644 = vlaneseq
    %v645 = vshrl.u32 %v644, 7
    %v646 = vsub.s32 0, %v645
    %v647 = vrot.slane %v642, %v646
    %v665 = vunpack.c.l.b16 %v626
    %v666 = vunpack.c.l.b16 %v627
    %v667 = vunpack.c.l.b16 %v628
    %v668 = vunpack.c.l.b16 %v629
    %v669 = vunpack.c.l.b16 %v630
    %v670 = vunpack.c.l.b16 %v631
    %v671 = vunpack.c.l.b16 %v632
    %v672 = vunpack.c.l.b16 %v633
    %v673 = vunpack.c.l.b16 %v634
    %v674 = vunpack.c.l.b16 %v635
    %v675 = vunpack.c.l.b16 %v636
    %v676 = vunpack.c.l.b16 %v637
    %v677 = vunpack.c.l.b16 %v638
    %v678 = vunpack.c.l.b16 %v639
    %v679 = vunpack.c.l.b16 %v640
    %v680 = vunpack.c.l.b16 %v641
    %v681 = vpack.c.b16 %v666, %v665
    %v682 = vpack.c.b16 %v668, %v667
    %v683 = vpack.c.b16 %v670, %v669
    %v684 = vpack.c.b16 %v672, %v671
    %v685 = vpack.c.b16 %v674, %v673
    %v686 = vpack.c.b16 %v676, %v675
    %v687 = vpack.c.b16 %v678, %v677
    %v688 = vpack.c.b16 %v680, %v679
    %697 = vmatprep.subr.bf16.mxu0 0
    %698 = vmatpush1.bf16.msra.mxu0 %v681
    %699 = vmatprep.subr.bf16.mxu0 0
    %700 = vmatpush1.bf16.msra.mxu0 %v682
    %701 = vmatprep.subr.bf16.mxu0 0
    %702 = vmatpush1.bf16.msra.mxu0 %v683
    %703 = vmatprep.subr.bf16.mxu0 0
    %704 = vmatpush1.bf16.msra.mxu0 %v684
    %705 = vmatprep.subr.bf16.mxu0 0
    %706 = vmatpush1.bf16.msra.mxu0 %v685
    %707 = vmatprep.subr.bf16.mxu0 0
    %708 = vmatpush1.bf16.msra.mxu0 %v686
    %709 = vmatprep.subr.bf16.mxu0 0
    %710 = vmatpush1.bf16.msra.mxu0 %v687
    %711 = vmatprep.subr.bf16.mxu0 0
    %712 = vmatpush1.bf16.msra.mxu0 %v688
    %713 = vmatprep.subr.bf16.mxu0 0
    %714 = vmatpush1.bf16.msra.mxu0 0
    %715 = vmatprep.subr.bf16.mxu0 0
    %716 = vmatpush1.bf16.msra.mxu0 0
    %717 = vmatprep.subr.bf16.mxu0 0
    %718 = vmatpush1.bf16.msra.mxu0 0
    %719 = vmatprep.subr.bf16.mxu0 0
    %720 = vmatpush1.bf16.msra.mxu0 0
    %721 = vmatprep.subr.bf16.mxu0 0
    %722 = vmatpush1.bf16.msra.mxu0 0
    %723 = vmatprep.subr.bf16.mxu0 0
    %724 = vmatpush1.bf16.msra.mxu0 0
    %725 = vmatprep.subr.bf16.mxu0 0
    %726 = vmatpush1.bf16.msra.mxu0 0
    %727 = vmatprep.subr.bf16.mxu0 0
    %728 = vmatpush1.bf16.msra.mxu0 0
    %729 = vmatprep.mubr.bf16.mxu0 0
    %730 = vmatmul.mubr.bf16.gmra.mrb[0].mxu0 %v625
    %v731 = vpop.f32.mrb[0].mxu0
    %v732 = vadd.f32 %v647, %v731
    %v733 = vpop.f32.mrb[0].mxu0
    %v734 = vpop.f32.mrb[0].mxu0
    %v735 = vpop.f32.mrb[0].mxu0
    %736 = vdwg.mxu0
    %v737 = vmax.f32 %v732, 0.0
    %vm738 = vcmask 80896
    %739 = vst.msk [vmem:[#allocation2] sm:$0xff] %vm738, %v737
    // Predicated region
    $region22: #{net_forward.1} parent=1 // pred_check
      _
    $region23: #{net_forward.1} parent=1 // pred_check_branch
      %741 = sbr.rel (0) target = $region25
    $region24: #{net_forward.1} parent=1 // pred_region
      %s743 = ssub.s32 128, 64
      %744 = vsyncadd [#allocation3], %s743
      %s745 = sshll.u32 [#allocation2], 4
      %s746 = int_to_ptr.vmem [resolvable:$true] %s745
      %751 = dma.vmem_to_hbm [thread:$0]  %s746, 64, %s5, [#allocation3], 64, 64, 4
    $region25: #{net_forward.1} parent=1 // pred_fallthru
      _
    // Predicated region
    $region26: #{net_forward.1} parent=1 // pred_check
      _
    $region27: #{net_forward.1} parent=1 // pred_check_branch
      %753 = sbr.rel (0) target = $region29
    $region28: #{net_forward.1} parent=1 // pred_region
      %754 = dma.done [#allocation3], 128
    $region29: #{net_forward.1} parent=1 // pred_fallthru
      _
    %755 = vsyncpa [#allocation3], 1

</llo_original>
